<compile_context>
chip_gen: v7x
topology: tpu7x:2x2x1
jax: 0.10.0
libtpu: 0.0.40
codegen_flags: <defaults>
</compile_context>

<pallas_src>
import jax
import jax.numpy as jnp
from jax.experimental import pallas as pl
from jax.experimental.pallas import tpu as pltpu


def _fused_linear_bn_silu_kernel(x_ref, w_ref, b_ref, o_ref, acc_ref):
    """Computes one (tm, tn) output tile; grid axis 2 walks the K reduction.

    x_ref: (tm, tk)   w_ref: (tk, tn)   b_ref: (1, tn)
    o_ref: (tm, tn)   acc_ref: (tm, tn) f32 scratch, lives across K steps.
    """
    k = pl.program_id(2)

    @pl.when(k == 0)
    def _():
        acc_ref[...] = jnp.zeros_like(acc_ref)

    acc_ref[...] += jnp.dot(x_ref[...], w_ref[...],
                            preferred_element_type=jnp.float32)

    @pl.when(k == pl.num_programs(2) - 1)
    def _():
        z = acc_ref[...] + b_ref[...]          # BN already folded into bias
        sig = 1.0 / (1.0 + jnp.exp(-z))        # SiLU = z * sigmoid(z)
        o_ref[...] = (z * sig).astype(o_ref.dtype)


def _round_up(x, m):
    return ((x + m - 1) // m) * m


def mlp_expansion(x, weight, bias, bn_gamma, bn_beta, bn_mean, bn_var, *,
                  eps=1e-5, block_m=256, block_n=512, block_k=512,
                  out_dtype=None):
    """Pallas equivalent of MLPExpantion.forward (eval-mode BatchNorm).

    x:       (M, in_features)  float32
    weight:  (out_features, in_features)  -- torch nn.Linear layout
    bias:    (out_features,)
    bn_*:    (out_features,)   BatchNorm1d affine params + running stats
    Returns (M, out_features) in `out_dtype` (default: x.dtype).
    """
    x = jnp.asarray(x, jnp.float32)
    M, K = x.shape
    N = weight.shape[0]
    out_dtype = x.dtype if out_dtype is None else out_dtype

    # ---- Fold BatchNorm (running stats) into the linear weight / bias ----
    inv_std = jax.lax.rsqrt(bn_var.astype(jnp.float32) + jnp.float32(eps))
    scale = bn_gamma.astype(jnp.float32) * inv_std                     # (N,)
    w_f = (weight.astype(jnp.float32) * scale[:, None]).T              # (K, N)
    b_f = (bias.astype(jnp.float32) - bn_mean.astype(jnp.float32)) * scale \
          + bn_beta.astype(jnp.float32)                                # (N,)

    # ---- Choose tiles; pad so blocks divide evenly and lanes are dense ----
    tm = min(block_m, _round_up(M, 8))      # sublane dim: multiple of 8
    tn = min(block_n, _round_up(N, 128))    # lane dim:    multiple of 128
    tk = min(block_k, _round_up(K, 128))    # lane dim of x / sublane of w
    Mp, Np, Kp = _round_up(M, tm), _round_up(N, tn), _round_up(K, tk)

    xp = jnp.zeros((Mp, Kp), jnp.float32).at[:M, :K].set(x)
    wp = jnp.zeros((Kp, Np), jnp.float32).at[:K, :N].set(w_f)
    bp = jnp.zeros((1, Np), jnp.float32).at[0, :N].set(b_f)

    grid = (Mp // tm, Np // tn, Kp // tk)

    out = pl.pallas_call(
        _fused_linear_bn_silu_kernel,
        out_shape=jax.ShapeDtypeStruct((Mp, Np), out_dtype),
        grid_spec=pltpu.PrefetchScalarGridSpec(
            num_scalar_prefetch=0,
            grid=grid,
            in_specs=[
                pl.BlockSpec((tm, tk), lambda i, j, k: (i, k)),   # x tile
                pl.BlockSpec((tk, tn), lambda i, j, k: (k, j)),   # folded W tile
                pl.BlockSpec((1, tn), lambda i, j, k: (0, j)),    # folded bias
            ],
            out_specs=pl.BlockSpec((tm, tn), lambda i, j, k: (i, j)),
            scratch_shapes=[pltpu.VMEM((tm, tn), jnp.float32)],
        ),
        compiler_params=pltpu.CompilerParams(
            dimension_semantics=("parallel", "parallel", "arbitrary")),
    )(xp, wp, bp)

    return out[:M, :N]


def _reference(x, weight, bias, gamma, beta, mean, var, eps=1e-5):
    """Pure-JAX reference: Linear -> BatchNorm1d(eval) -> SiLU."""
    z = jnp.dot(x, weight.T, precision=jax.lax.Precision.HIGHEST) + bias
    z = (z - mean) * jax.lax.rsqrt(var + eps) * gamma + beta
    return z * (1.0 / (1.0 + jnp.exp(-z)))


if __name__ == "__main__":
    key = jax.random.PRNGKey(0)
    k1, k2, k3, k4, k5, k6, k7 = jax.random.split(key, 7)

    batch, in_features, out_features = 64, 32, 48

    x = jax.random.normal(k1, (batch, in_features), jnp.float32)
    weight = jax.random.normal(k2, (out_features, in_features),
                               jnp.float32) / jnp.sqrt(in_features)
    bias = 0.1 * jax.random.normal(k3, (out_features,), jnp.float32)
    bn_gamma = 1.0 + 0.1 * jax.random.normal(k4, (out_features,), jnp.float32)
    bn_beta = 0.1 * jax.random.normal(k5, (out_features,), jnp.float32)
    bn_mean = 0.1 * jax.random.normal(k6, (out_features,), jnp.float32)
    bn_var = jax.random.uniform(k7, (out_features,), jnp.float32,
                                minval=0.5, maxval=1.5)

    out = mlp_expansion(x, weight, bias, bn_gamma, bn_beta, bn_mean, bn_var)
    out = jax.block_until_ready(out)

    ref = _reference(x, weight, bias, bn_gamma, bn_beta, bn_mean, bn_var)
    assert out.shape == (batch, out_features)
    # Tolerance allows for possible MXU bf16-pass rounding in the f32 matmul;
    # semantic errors (wrong BN fold / missing SiLU) would be O(0.1-1).
    err = float(jnp.max(jnp.abs(out - ref)))
    assert jnp.allclose(out, ref, atol=1e-2, rtol=1e-2), err

    print("KERNEL_OK")
</pallas_src>

<mosaic_0001>
module attributes {stable_mosaic.version = 11 : i64} {
  func.func @_fused_linear_bn_silu_kernel(%arg0: i32, %arg1: i32, %arg2: i32, %arg3: memref<64x128xf32, #tpu.memory_space<vmem>>, %arg4: memref<128x128xf32, #tpu.memory_space<vmem>>, %arg5: memref<1x128xf32, #tpu.memory_space<vmem>>, %arg6: memref<64x128xf32, #tpu.memory_space<vmem>>, %arg7: memref<64x128xf32, #tpu.memory_space<vmem>>) attributes {dimension_semantics = [#tpu.dimension_semantics<parallel>, #tpu.dimension_semantics<parallel>, #tpu.dimension_semantics<arbitrary>], iteration_bounds = array<i64: 1, 1, 1>, scalar_prefetch = 0 : i64, scratch_operands = 1 : i64, tpu.core_type = #tpu.core_type<tc>, window_params = [{transform_indices = @transform_0, window_bounds = array<i64: 64, 128>}, {transform_indices = @transform_1, window_bounds = array<i64: 128, 128>}, {transform_indices = @transform_2, window_bounds = array<i64: 1, 128>}, {transform_indices = @transform_3, window_bounds = array<i64: 64, 128>}]} {
    %c0_i32 = arith.constant 0 : i32
    %0 = arith.cmpi eq, %arg2, %c0_i32 : i32
    %1 = arith.extui %0 : i1 to i32
    %c0_i32_0 = arith.constant 0 : i32
    %2 = arith.cmpi ne, %1, %c0_i32_0 : i32
    scf.if %2 {
      %cst_10 = arith.constant 0.000000e+00 : f32
      %12 = vector.broadcast %cst_10 : f32 to vector<64x128xf32>
      %c0_11 = arith.constant 0 : index
      %c0_12 = arith.constant 0 : index
      %13 = vector.load %arg7[%c0_11, %c0_12] : memref<64x128xf32, #tpu.memory_space<vmem>>, vector<64x128xf32>
      tpu.vector_store %arg7[%c0_11, %c0_12], %12 {strides = array<i32>} : memref<64x128xf32, #tpu.memory_space<vmem>>, vector<64x128xf32>,
    } else {
    }
    %c0 = arith.constant 0 : index
    %c0_1 = arith.constant 0 : index
    %3 = vector.load %arg7[%c0, %c0_1] : memref<64x128xf32, #tpu.memory_space<vmem>>, vector<64x128xf32>
    %c0_2 = arith.constant 0 : index
    %c0_3 = arith.constant 0 : index
    %4 = vector.load %arg3[%c0_2, %c0_3] : memref<64x128xf32, #tpu.memory_space<vmem>>, vector<64x128xf32>
    %c0_4 = arith.constant 0 : index
    %c0_5 = arith.constant 0 : index
    %5 = vector.load %arg4[%c0_4, %c0_5] : memref<128x128xf32, #tpu.memory_space<vmem>>, vector<128x128xf32>
    %cst = arith.constant dense<0.000000e+00> : vector<64x128xf32>
    %6 = tpu.matmul %4, %5, %cst {dimension_numbers = #tpu.dot_dimension_numbers<[1], [0], [0], [1], [0, 0, 1, 1], [], []>} : vector<64x128xf32>, vector<128x128xf32>, vector<64x128xf32> -> vector<64x128xf32>
    %7 = arith.addf %3, %6 : vector<64x128xf32>
    %c0_6 = arith.constant 0 : index
    %c0_7 = arith.constant 0 : index
    %8 = vector.load %arg7[%c0_6, %c0_7] : memref<64x128xf32, #tpu.memory_space<vmem>>, vector<64x128xf32>
    tpu.vector_store %arg7[%c0_6, %c0_7], %7 {strides = array<i32>} : memref<64x128xf32, #tpu.memory_space<vmem>>, vector<64x128xf32>,
    %c0_i32_8 = arith.constant 0 : i32
    %9 = arith.cmpi eq, %arg2, %c0_i32_8 : i32
    %10 = arith.extui %9 : i1 to i32
    %c0_i32_9 = arith.constant 0 : i32
    %11 = arith.cmpi ne, %10, %c0_i32_9 : i32
    scf.if %11 {
      %c0_10 = arith.constant 0 : index
      %c0_11 = arith.constant 0 : index
      %12 = vector.load %arg7[%c0_10, %c0_11] : memref<64x128xf32, #tpu.memory_space<vmem>>, vector<64x128xf32>
      %c0_12 = arith.constant 0 : index
      %c0_13 = arith.constant 0 : index
      %13 = vector.load %arg5[%c0_12, %c0_13] : memref<1x128xf32, #tpu.memory_space<vmem>>, vector<1x128xf32>
      %14 = vector.broadcast %13 : vector<1x128xf32> to vector<64x128xf32>
      %15 = arith.addf %12, %14 : vector<64x128xf32>
      %cst_14 = arith.constant 0.000000e+00 : f32
      %16 = vector.broadcast %cst_14 : f32 to vector<64x128xf32>
      %17 = arith.subf %16, %15 : vector<64x128xf32>
      %18 = math.exp %17 : vector<64x128xf32>
      %cst_15 = arith.constant 1.000000e+00 : f32
      %19 = vector.broadcast %cst_15 : f32 to vector<64x128xf32>
      %20 = arith.addf %19, %18 : vector<64x128xf32>
      %cst_16 = arith.constant 1.000000e+00 : f32
      %21 = vector.broadcast %cst_16 : f32 to vector<64x128xf32>
      %22 = arith.divf %21, %20 : vector<64x128xf32>
      %23 = arith.mulf %15, %22 : vector<64x128xf32>
      %c0_17 = arith.constant 0 : index
      %c0_18 = arith.constant 0 : index
      %24 = vector.load %arg6[%c0_17, %c0_18] : memref<64x128xf32, #tpu.memory_space<vmem>>, vector<64x128xf32>
      tpu.vector_store %arg6[%c0_17, %c0_18], %23 {strides = array<i32>} : memref<64x128xf32, #tpu.memory_space<vmem>>, vector<64x128xf32>,
    } else {
    }
    return
  }
  func.func @transform_0(%arg0: i32, %arg1: i32, %arg2: i32) -> (i32, i32) {
    %c0_i32 = arith.constant 0 : i32
    return %arg0, %arg2 : i32, i32
  }
  func.func @transform_1(%arg0: i32, %arg1: i32, %arg2: i32) -> (i32, i32) {
    %c0_i32 = arith.constant 0 : i32
    return %arg2, %arg1 : i32, i32
  }
  func.func @transform_2(%arg0: i32, %arg1: i32, %arg2: i32) -> (i32, i32) {
    %c0_i32 = arith.constant 0 : i32
    %c0_i32_0 = arith.constant 0 : i32
    return %c0_i32, %arg1 : i32, i32
  }
  func.func @transform_3(%arg0: i32, %arg1: i32, %arg2: i32) -> (i32, i32) {
    %c0_i32 = arith.constant 0 : i32
    return %arg0, %arg1 : i32, i32
  }
}

</mosaic_0001>

<llo_original>
// kernel: tpu_custom_call.1
$region0: #{tpu_custom_call.1}
  #allocation0 [shape = 'u32[]', space=smem, size = 0x4, offset = 0x4, fixed_abs, tag = 'smem constant byte address 0x4 - core index']
  #allocation1 [shape = 'u32[144,128]{1,0:T(1,128)}', space=vmem, size = 0x12000, scoped, tag = 'internal scratch']
  #allocation2 [shape = 'f32[64,128]{1,0:T(8,128)}', space=vmem, size = 0x8000, scoped, tag = 'scratch operand']
  %s0 = inlined_call_operand.hbm [shape: f32[64,128], index: 0, kind: input, shape index: {}]
  %s1 = inlined_call_operand.hbm [shape: f32[128,128], index: 1, kind: input, shape index: {}]
  %s2 = inlined_call_operand.vmem [shape: f32[1,128], index: 2, kind: input, shape index: {}]
  %s3 = inlined_call_operand.hbm [shape: f32[64,128], index: 3, kind: output, shape index: {}]
  %s4 = sld [smem:[#allocation0]]
  $region38: #{tpu_custom_call.1} parent=0
    _
  %s6 = ssub.s32 1, %s4
  %s7 = scalar_select 0, %s6, %s4
  $region1: #{tpu_custom_call.1} parent=0
    #allocation3 [shape = 'u8[32768]{0}', space=vmem, size = 0x8000, scoped, tag = 'input window, operand 0, single buffered']
    #allocation4 [shape = 's32[1]{0}', space=sflag, size = 0x4, scoped, tag = 'scoped memory for tpu_custom_call.1']
    #allocation5 [shape = 's32[1]{0}', space=sflag, size = 0x4, scoped, tag = 'scoped memory for tpu_custom_call.1']
    #allocation6 [shape = 'u8[65536]{0}', space=vmem, size = 0x10000, scoped, tag = 'input window, operand 1, single buffered']
    #allocation7 [shape = 's32[1]{0}', space=sflag, size = 0x4, scoped, tag = 'scoped memory for tpu_custom_call.1']
    #allocation8 [shape = 'u8[32768]{0}', space=vmem, size = 0x8000, scoped, tag = 'output window, operand 0, single buffered']
    %8 = vsyncpa [#allocation4], 0
    %9 = vsyncpa [#allocation7], 0
    %10 = vsyncpa [#allocation5], 0
    // Predicated region
    $region2: #{tpu_custom_call.1} parent=1 // pred_check
      _
    $region3: #{tpu_custom_call.1} parent=1 // pred_check_branch
      %12 = sbr.rel (0) target = $region5
    $region4: #{tpu_custom_call.1} parent=1 // pred_region
      %s14 = ssub.s32 1024, 1024
      %15 = vsyncadd [#allocation4], %s14
      %s16 = sshll.u32 [#allocation3], 4
      %s17 = int_to_ptr.vmem [resolvable:$true] %s16
      %22 = dma.hbm_to_vmem [thread:$0]  %s0, 1024, %s17, [#allocation4], 128, 128, 8
    $region5: #{tpu_custom_call.1} parent=1 // pred_fallthru
      _
    // Predicated region
    $region6: #{tpu_custom_call.1} parent=1 // pred_check
      _
    $region7: #{tpu_custom_call.1} parent=1 // pred_check_branch
      %24 = sbr.rel (0) target = $region9
    $region8: #{tpu_custom_call.1} parent=1 // pred_region
      %s26 = ssub.s32 2048, 2048
      %27 = vsyncadd [#allocation7], %s26
      %s28 = sshll.u32 [#allocation6], 4
      %s29 = int_to_ptr.vmem [resolvable:$true] %s28
      %34 = dma.hbm_to_vmem [thread:$0]  %s1, 2048, %s29, [#allocation7], 128, 128, 8
    $region9: #{tpu_custom_call.1} parent=1 // pred_fallthru
      _
    // Predicated region
    $region10: #{tpu_custom_call.1} parent=1 // pred_check
      _
    $region11: #{tpu_custom_call.1} parent=1 // pred_check_branch
      %36 = sbr.rel (0) target = $region13
    $region12: #{tpu_custom_call.1} parent=1 // pred_region
      _
    $region13: #{tpu_custom_call.1} parent=1 // pred_fallthru
      _
    // Predicated region
    $region14: #{tpu_custom_call.1} parent=1 // pred_check
      _
    $region15: #{tpu_custom_call.1} parent=1 // pred_check_branch
      %38 = sbr.rel (0) target = $region17
    $region16: #{tpu_custom_call.1} parent=1 // pred_region
      %39 = dma.done [#allocation4], 1024
    $region17: #{tpu_custom_call.1} parent=1 // pred_fallthru
      _
    // Predicated region
    $region18: #{tpu_custom_call.1} parent=1 // pred_check
      _
    $region19: #{tpu_custom_call.1} parent=1 // pred_check_branch
      %41 = sbr.rel (0) target = $region21
    $region20: #{tpu_custom_call.1} parent=1 // pred_region
      %42 = dma.done [#allocation7], 2048
    $region21: #{tpu_custom_call.1} parent=1 // pred_fallthru
      _
    %p43 = scmp.eq.s32.totalorder 0, 0
    // Predicated region
    $region22: #{tpu_custom_call.1} parent=1 // pred_check
      %p44 = pneg %p43
    $region23: #{tpu_custom_call.1} parent=1 // pred_check_branch
      %46 = sbr.rel (%p44) target = $region25
    $region24: #{tpu_custom_call.1} parent=1 // pred_region
      %47 = vst [vmem:[#allocation2] sm:$0xff] 0.0
      %48 = vst [vmem:[#allocation2 + $0x8] sm:$0xff] 0.0
      %49 = vst [vmem:[#allocation2 + $0x10] sm:$0xff] 0.0
      %50 = vst [vmem:[#allocation2 + $0x18] sm:$0xff] 0.0
      %51 = vst [vmem:[#allocation2 + $0x20] sm:$0xff] 0.0
      %52 = vst [vmem:[#allocation2 + $0x28] sm:$0xff] 0.0
      %53 = vst [vmem:[#allocation2 + $0x30] sm:$0xff] 0.0
      %54 = vst [vmem:[#allocation2 + $0x38] sm:$0xff] 0.0
    $region25: #{tpu_custom_call.1} parent=1 // pred_fallthru
      _
    %v55 = vld [vmem:[#allocation2] sm:$0xff]
    %v56 = vld [vmem:[#allocation2 + $0x8] sm:$0xff]
    %v57 = vld [vmem:[#allocation2 + $0x10] sm:$0xff]
    %v58 = vld [vmem:[#allocation2 + $0x18] sm:$0xff]
    %v59 = vld [vmem:[#allocation2 + $0x20] sm:$0xff]
    %v60 = vld [vmem:[#allocation2 + $0x28] sm:$0xff]
    %v61 = vld [vmem:[#allocation2 + $0x30] sm:$0xff]
    %v62 = vld [vmem:[#allocation2 + $0x38] sm:$0xff]
    %v63 = vld [vmem:[#allocation3] sm:$0xff]
    %v64 = vld [vmem:[#allocation3 + $0x8] sm:$0xff]
    %v65 = vld [vmem:[#allocation3 + $0x10] sm:$0xff]
    %v66 = vld [vmem:[#allocation3 + $0x18] sm:$0xff]
    %v67 = vld [vmem:[#allocation3 + $0x20] sm:$0xff]
    %v68 = vld [vmem:[#allocation3 + $0x28] sm:$0xff]
    %v69 = vld [vmem:[#allocation3 + $0x30] sm:$0xff]
    %v70 = vld [vmem:[#allocation3 + $0x38] sm:$0xff]
    %v71 = vld [vmem:[#allocation6] sm:$0xff]
    %v72 = vld [vmem:[#allocation6 + $0x8] sm:$0xff]
    %v73 = vld [vmem:[#allocation6 + $0x10] sm:$0xff]
    %v74 = vld [vmem:[#allocation6 + $0x18] sm:$0xff]
    %v75 = vld [vmem:[#allocation6 + $0x20] sm:$0xff]
    %v76 = vld [vmem:[#allocation6 + $0x28] sm:$0xff]
    %v77 = vld [vmem:[#allocation6 + $0x30] sm:$0xff]
    %v78 = vld [vmem:[#allocation6 + $0x38] sm:$0xff]
    %v79 = vld [vmem:[#allocation6 + $0x40] sm:$0xff]
    %v80 = vld [vmem:[#allocation6 + $0x48] sm:$0xff]
    %v81 = vld [vmem:[#allocation6 + $0x50] sm:$0xff]
    %v82 = vld [vmem:[#allocation6 + $0x58] sm:$0xff]
    %v83 = vld [vmem:[#allocation6 + $0x60] sm:$0xff]
    %v84 = vld [vmem:[#allocation6 + $0x68] sm:$0xff]
    %v85 = vld [vmem:[#allocation6 + $0x70] sm:$0xff]
    %v86 = vld [vmem:[#allocation6 + $0x78] sm:$0xff]
    %87 = vmatprep.subr.mxu0 0.0
    %88 = vmatpush1.msra.mxu0 %v71
    %89 = vmatprep.subr.mxu0 0.0
    %90 = vmatpush1.msra.mxu0 %v72
    %91 = vmatprep.subr.mxu0 0.0
    %92 = vmatpush1.msra.mxu0 %v73
    %93 = vmatprep.subr.mxu0 0.0
    %94 = vmatpush1.msra.mxu0 %v74
    %95 = vmatprep.subr.mxu0 0.0
    %96 = vmatpush1.msra.mxu0 %v75
    %97 = vmatprep.subr.mxu0 0.0
    %98 = vmatpush1.msra.mxu0 %v76
    %99 = vmatprep.subr.mxu0 0.0
    %100 = vmatpush1.msra.mxu0 %v77
    %101 = vmatprep.subr.mxu0 0.0
    %102 = vmatpush1.msra.mxu0 %v78
    %103 = vmatprep.subr.mxu0 0.0
    %104 = vmatpush1.msra.mxu0 %v79
    %105 = vmatprep.subr.mxu0 0.0
    %106 = vmatpush1.msra.mxu0 %v80
    %107 = vmatprep.subr.mxu0 0.0
    %108 = vmatpush1.msra.mxu0 %v81
    %109 = vmatprep.subr.mxu0 0.0
    %110 = vmatpush1.msra.mxu0 %v82
    %111 = vmatprep.subr.mxu0 0.0
    %112 = vmatpush1.msra.mxu0 %v83
    %113 = vmatprep.subr.mxu0 0.0
    %114 = vmatpush1.msra.mxu0 %v84
    %115 = vmatprep.subr.mxu0 0.0
    %116 = vmatpush1.msra.mxu0 %v85
    %117 = vmatprep.subr.mxu0 0.0
    %118 = vmatpush1.msra.mxu0 %v86
    %119 = vmatprep.subr.mxu0 0.0
    %120 = vmatpush1.msra.mxu0 0.0
    %121 = vmatprep.subr.mxu0 0.0
    %122 = vmatpush1.msra.mxu0 0.0
    %123 = vmatprep.subr.mxu0 0.0
    %124 = vmatpush1.msra.mxu0 0.0
    %125 = vmatprep.subr.mxu0 0.0
    %126 = vmatpush1.msra.mxu0 0.0
    %127 = vmatprep.subr.mxu0 0.0
    %128 = vmatpush1.msra.mxu0 0.0
    %129 = vmatprep.subr.mxu0 0.0
    %130 = vmatpush1.msra.mxu0 0.0
    %131 = vmatprep.subr.mxu0 0.0
    %132 = vmatpush1.msra.mxu0 0.0
    %133 = vmatprep.subr.mxu0 0.0
    %134 = vmatpush1.msra.mxu0 0.0
    %135 = vmatprep.subr.mxu0 0.0
    %136 = vmatpush1.msra.mxu0 0.0
    %137 = vmatprep.subr.mxu0 0.0
    %138 = vmatpush1.msra.mxu0 0.0
    %139 = vmatprep.subr.mxu0 0.0
    %140 = vmatpush1.msra.mxu0 0.0
    %141 = vmatprep.subr.mxu0 0.0
    %142 = vmatpush1.msra.mxu0 0.0
    %143 = vmatprep.subr.mxu0 0.0
    %144 = vmatpush1.msra.mxu0 0.0
    %145 = vmatprep.subr.mxu0 0.0
    %146 = vmatpush1.msra.mxu0 0.0
    %147 = vmatprep.subr.mxu0 0.0
    %148 = vmatpush1.msra.mxu0 0.0
    %149 = vmatprep.subr.mxu0 0.0
    %150 = vmatpush1.msra.mxu0 0.0
    %151 = vmatprep.mubr.f32.mxu0 0.0
    %152 = vmatmul.mubr.f32.gmra.mrb[0].mxu0 %v63
    %v153 = vpop.f32.mrb[0].mxu0
    %v154 = vadd.f32 0.0, %v153
    %v155 = vpop.f32.mrb[0].mxu0
    %156 = vmatprep.mubr.f32.mxu0 0.0
    %157 = vmatmul.mubr.f32.gmra.mrb[0].mxu0 %v64
    %v158 = vpop.f32.mrb[0].mxu0
    %v159 = vadd.f32 0.0, %v158
    %v160 = vpop.f32.mrb[0].mxu0
    %161 = vmatprep.mubr.f32.mxu0 0.0
    %162 = vmatmul.mubr.f32.gmra.mrb[0].mxu0 %v65
    %v163 = vpop.f32.mrb[0].mxu0
    %v164 = vadd.f32 0.0, %v163
    %v165 = vpop.f32.mrb[0].mxu0
    %166 = vmatprep.mubr.f32.mxu0 0.0
    %167 = vmatmul.mubr.f32.gmra.mrb[0].mxu0 %v66
    %v168 = vpop.f32.mrb[0].mxu0
    %v169 = vadd.f32 0.0, %v168
    %v170 = vpop.f32.mrb[0].mxu0
    %171 = vmatprep.mubr.f32.mxu0 0.0
    %172 = vmatmul.mubr.f32.gmra.mrb[0].mxu0 %v67
    %v173 = vpop.f32.mrb[0].mxu0
    %v174 = vadd.f32 0.0, %v173
    %v175 = vpop.f32.mrb[0].mxu0
    %176 = vmatprep.mubr.f32.mxu0 0.0
    %177 = vmatmul.mubr.f32.gmra.mrb[0].mxu0 %v68
    %v178 = vpop.f32.mrb[0].mxu0
    %v179 = vadd.f32 0.0, %v178
    %v180 = vpop.f32.mrb[0].mxu0
    %181 = vmatprep.mubr.f32.mxu0 0.0
    %182 = vmatmul.mubr.f32.gmra.mrb[0].mxu0 %v69
    %v183 = vpop.f32.mrb[0].mxu0
    %v184 = vadd.f32 0.0, %v183
    %v185 = vpop.f32.mrb[0].mxu0
    %186 = vmatprep.mubr.f32.mxu0 0.0
    %187 = vmatmul.mubr.f32.gmra.mrb[0].mxu0 %v70
    %v188 = vpop.f32.mrb[0].mxu0
    %v189 = vadd.f32 0.0, %v188
    %v190 = vpop.f32.mrb[0].mxu0
    %191 = vdwg.mxu0
    %v192 = vadd.f32 %v55, %v154
    %v193 = vadd.f32 %v56, %v159
    %v194 = vadd.f32 %v57, %v164
    %v195 = vadd.f32 %v58, %v169
    %v196 = vadd.f32 %v59, %v174
    %v197 = vadd.f32 %v60, %v179
    %v198 = vadd.f32 %v61, %v184
    %v199 = vadd.f32 %v62, %v189
    %200 = vst [vmem:[#allocation2] sm:$0xff] %v192
    %201 = vst [vmem:[#allocation2 + $0x8] sm:$0xff] %v193
    %202 = vst [vmem:[#allocation2 + $0x10] sm:$0xff] %v194
    %203 = vst [vmem:[#allocation2 + $0x18] sm:$0xff] %v195
    %204 = vst [vmem:[#allocation2 + $0x20] sm:$0xff] %v196
    %205 = vst [vmem:[#allocation2 + $0x28] sm:$0xff] %v197
    %206 = vst [vmem:[#allocation2 + $0x30] sm:$0xff] %v198
    %207 = vst [vmem:[#allocation2 + $0x38] sm:$0xff] %v199
    // Predicated region
    $region26: #{tpu_custom_call.1} parent=1 // pred_check
      %p208 = pneg %p43
    $region27: #{tpu_custom_call.1} parent=1 // pred_check_branch
      %210 = sbr.rel (%p208) target = $region29
    $region28: #{tpu_custom_call.1} parent=1 // pred_region
      %v211 = vld [vmem:[#allocation2] sm:$0xff]
      %v212 = vld [vmem:[#allocation2 + $0x8] sm:$0xff]
      %v213 = vld [vmem:[#allocation2 + $0x10] sm:$0xff]
      %v214 = vld [vmem:[#allocation2 + $0x18] sm:$0xff]
      %v215 = vld [vmem:[#allocation2 + $0x20] sm:$0xff]
      %v216 = vld [vmem:[#allocation2 + $0x28] sm:$0xff]
      %v217 = vld [vmem:[#allocation2 + $0x30] sm:$0xff]
      %v218 = vld [vmem:[#allocation2 + $0x38] sm:$0xff]
      %v219 = vld [vmem:[%s2] sm:$0x1]
      %v221 = vlaneseq
      %v222 = vshrl.u32 %v221, 7
      %v223 = vsub.s32 0, %v222
      %v224 = vrot.slane %v219, %v223
      %v226 = vadd.f32 %v211, %v224
      %v227 = vadd.f32 %v212, %v224
      %v228 = vadd.f32 %v213, %v224
      %v229 = vadd.f32 %v214, %v224
      %v230 = vadd.f32 %v215, %v224
      %v231 = vadd.f32 %v216, %v224
      %v232 = vadd.f32 %v217, %v224
      %v233 = vadd.f32 %v218, %v224
      %v234 = vsub.f32 0.0, %v226
      %v235 = vsub.f32 0.0, %v227
      %v236 = vsub.f32 0.0, %v228
      %v237 = vsub.f32 0.0, %v229
      %v238 = vsub.f32 0.0, %v230
      %v239 = vsub.f32 0.0, %v231
      %v240 = vsub.f32 0.0, %v232
      %v241 = vsub.f32 0.0, %v233
      %v242 = vmul.f32 %v234, 1.442695
      %v243 = vpow.pop %v242
      %v244 = vmul.f32 %v235, 1.442695
      %v245 = vpow.pop %v244
      %v246 = vmul.f32 %v236, 1.442695
      %v247 = vpow.pop %v246
      %v248 = vmul.f32 %v237, 1.442695
      %v249 = vpow.pop %v248
      %v250 = vmul.f32 %v238, 1.442695
      %v251 = vpow.pop %v250
      %v252 = vmul.f32 %v239, 1.442695
      %v253 = vpow.pop %v252
      %v254 = vmul.f32 %v240, 1.442695
      %v255 = vpow.pop %v254
      %v256 = vmul.f32 %v241, 1.442695
      %v257 = vpow.pop %v256
      %v258 = vadd.f32 %v243, 1.0
      %v259 = vadd.f32 %v245, 1.0
      %v260 = vadd.f32 %v247, 1.0
      %v261 = vadd.f32 %v249, 1.0
      %v262 = vadd.f32 %v251, 1.0
      %v263 = vadd.f32 %v253, 1.0
      %v264 = vadd.f32 %v255, 1.0
      %v265 = vadd.f32 %v257, 1.0
      %v266 = vrcp.pop %v258
      %v267 = vmul.f32 1.0, %v266
      %v268 = vrcp.pop %v259
      %v269 = vmul.f32 1.0, %v268
      %v270 = vrcp.pop %v260
      %v271 = vmul.f32 1.0, %v270
      %v272 = vrcp.pop %v261
      %v273 = vmul.f32 1.0, %v272
      %v274 = vrcp.pop %v262
      %v275 = vmul.f32 1.0, %v274
      %v276 = vrcp.pop %v263
      %v277 = vmul.f32 1.0, %v276
      %v278 = vrcp.pop %v264
      %v279 = vmul.f32 1.0, %v278
      %v280 = vrcp.pop %v265
      %v281 = vmul.f32 1.0, %v280
      %v282 = vmul.f32 %v226, %v267
      %v283 = vmul.f32 %v227, %v269
      %v284 = vmul.f32 %v228, %v271
      %v285 = vmul.f32 %v229, %v273
      %v286 = vmul.f32 %v230, %v275
      %v287 = vmul.f32 %v231, %v277
      %v288 = vmul.f32 %v232, %v279
      %v289 = vmul.f32 %v233, %v281
      %290 = vst [vmem:[#allocation8] sm:$0xff] %v282
      %291 = vst [vmem:[#allocation8 + $0x8] sm:$0xff] %v283
      %292 = vst [vmem:[#allocation8 + $0x10] sm:$0xff] %v284
      %293 = vst [vmem:[#allocation8 + $0x18] sm:$0xff] %v285
      %294 = vst [vmem:[#allocation8 + $0x20] sm:$0xff] %v286
      %295 = vst [vmem:[#allocation8 + $0x28] sm:$0xff] %v287
      %296 = vst [vmem:[#allocation8 + $0x30] sm:$0xff] %v288
      %297 = vst [vmem:[#allocation8 + $0x38] sm:$0xff] %v289
    $region29: #{tpu_custom_call.1} parent=1 // pred_fallthru
      _
    // Predicated region
    $region30: #{tpu_custom_call.1} parent=1 // pred_check
      _
    $region31: #{tpu_custom_call.1} parent=1 // pred_check_branch
      %299 = sbr.rel (0) target = $region33
    $region32: #{tpu_custom_call.1} parent=1 // pred_region
      %s301 = ssub.s32 1024, 1024
      %302 = vsyncadd [#allocation5], %s301
      %s303 = sshll.u32 [#allocation8], 4
      %s304 = int_to_ptr.vmem [resolvable:$true] %s303
      %309 = dma.vmem_to_hbm [thread:$0]  %s304, 1024, %s3, [#allocation5], 128, 128, 8
    $region33: #{tpu_custom_call.1} parent=1 // pred_fallthru
      _
    // Predicated region
    $region34: #{tpu_custom_call.1} parent=1 // pred_check
      _
    $region35: #{tpu_custom_call.1} parent=1 // pred_check_branch
      %311 = sbr.rel (0) target = $region37
    $region36: #{tpu_custom_call.1} parent=1 // pred_region
      %312 = dma.done [#allocation5], 1024
    $region37: #{tpu_custom_call.1} parent=1 // pred_fallthru
      _
    %313 = vsyncpa [#allocation4], 1
    %314 = vsyncpa [#allocation7], 1
    %315 = vsyncpa [#allocation5], 1

</llo_original>
